<compile_context>
chip_gen: v7x
topology: tpu7x:2x2x1
jax: 0.10.0
libtpu: 0.0.40
codegen_flags: <defaults>
</compile_context>

<pallas_src>
import math

import jax
import jax.numpy as jnp
from jax.experimental import pallas as pl
from jax.experimental.pallas import tpu as pltpu


# --------------------------------------------------------------------------- #
# VMEM budgeting (generation-aware)
# --------------------------------------------------------------------------- #
def _vmem_params():
    """Returns (per-block byte budget, cap on the scoped-VMEM limit)."""
    try:
        cap = int(pltpu.get_tpu_info().vmem_capacity_bytes)
    except Exception:
        cap = 64 * 1024 * 1024                       # conservative fallback
    if cap >= 96 * 1024 * 1024:                      # v5e / v6e: 128 MiB VMEM
        return 8 * 1024 * 1024, 96 * 1024 * 1024
    return 4 * 1024 * 1024, 40 * 1024 * 1024         # v7x: 64 MiB per TC


def _sublane_quantum(dtype):
    itemsize = jnp.dtype(dtype).itemsize
    return max(8, 32 // max(1, itemsize))            # 8 f32 / 16 bf16 / 32 i8


def _lane_block(extent, cap_elems):
    """Block for a dim facing a lane (minor-most) position: full extent, or a
    128-multiple (the ragged last tile is masked by Pallas)."""
    if extent <= cap_elems:
        return extent
    return max(128, (cap_elems // 128) * 128)


def _minor_block(extent, cap_elems, quantum):
    """Block for a non-lane dim: full extent or a sublane-quantum multiple."""
    if extent <= cap_elems:
        return extent
    return max(1, (cap_elems // quantum) * quantum)


# --------------------------------------------------------------------------- #
# Permutation bookkeeping (trace-time only, pure Python)
# --------------------------------------------------------------------------- #
def _normalize_order(order, ndim):
    order = tuple(int(d) % ndim for d in order)
    assert sorted(order) == list(range(ndim)), f"bad permute order {order}"
    return order


def _reduce_permute(shape, order):
    """Drop size-1 dims and merge input-dim runs that stay adjacent/in-order.

    Returns (reduced_input_shape, reduced_order)."""
    n = len(shape)
    keep = [d for d in range(n) if shape[d] != 1]
    if not keep:
        return (), ()
    remap = {d: i for i, d in enumerate(keep)}
    shape1 = [shape[d] for d in keep]
    order1 = [remap[d] for d in order if d in remap]

    groups = []
    cur = [order1[0]]
    for k in range(1, len(order1)):
        if order1[k] == cur[-1] + 1:
            cur.append(order1[k])
        else:
            groups.append(cur)
            cur = [order1[k]]
    groups.append(cur)

    groups_by_input = sorted(groups, key=lambda g: g[0])
    red_shape = tuple(int(math.prod(shape1[d] for d in g)) for g in groups_by_input)
    gid = {g[0]: i for i, g in enumerate(groups_by_input)}
    red_order = tuple(gid[g[0]] for g in groups)
    return red_shape, red_order


# --------------------------------------------------------------------------- #
# The single-pass Pallas kernel
# --------------------------------------------------------------------------- #
def _permute_pallas(x, order, block_budget_bytes=None):
    """Permute a reduced array (no size-1 dims, non-identity order) in ONE pass."""
    n = x.ndim
    in_shape = x.shape
    out_shape = tuple(in_shape[d] for d in order)
    inv = [0] * n
    for k, d in enumerate(order):
        inv[d] = k

    itemsize = jnp.dtype(x.dtype).itemsize
    budget_bytes, limit_cap = _vmem_params()
    if block_budget_bytes is not None:
        budget_bytes = int(block_budget_bytes)
    budget = max(128, budget_bytes // itemsize)
    quantum = _sublane_quantum(x.dtype)

    out_block = [1] * n
    keep_explicit_out = set()

    if order[-1] == n - 1:
        # ---- Copy path: output lane dim IS the input lane dim. --------------
        # Grow blocks along output positions whose input dims keep relative
        # order (maximal increasing subsequence of `order` ending at n-1), so
        # the in-block mapping is the identity -> pure copy kernel.
        # Position n-2 always qualifies -> sublane-dense unmasked stores.
        selected = [n - 1]
        min_ord = order[n - 1]
        for k in range(n - 2, -1, -1):
            if order[k] < min_ord:
                selected.append(k)
                min_ord = order[k]

        remaining = budget
        out_block[n - 1] = _lane_block(out_shape[n - 1], remaining)
        remaining = max(1, remaining // out_block[n - 1])
        for k in selected[1:]:
            if remaining <= 1:
                break
            out_block[k] = _minor_block(out_shape[k], remaining, quantum)
            remaining = max(1, remaining // out_block[k])

        # Avoid rank-1 kernel refs if only the lane dim grew.
        if all(s == 1 for k, s in enumerate(out_block) if k != n - 1):
            keep_explicit_out.add(n - 2)

        def kernel(x_ref, o_ref):
            # Non-unit block dims keep relative input/output order -> identity.
            o_ref[...] = x_ref[...]
    else:
        # ---- Transpose path: output lane dim is input dim q != n-1. ---------
        q = order[-1]            # input dim that becomes the output's last dim
        k0 = inv[n - 1]          # output position of the input's last dim
        a_full = in_shape[q]     # output lane extent
        b_full = in_shape[n - 1]  # input lane extent
        # Reserve room so input rows (b) stay reasonably long for HBM bursts,
        # but prefer a large `a` (output store width) - the bigger lever.
        b_reserve = b_full if b_full <= 512 else 512
        a = _lane_block(a_full, max(128, budget // max(1, b_reserve)))
        b = _lane_block(b_full, max(128, budget // max(1, a)))
        out_block[n - 1] = a
        out_block[k0] = b

        def kernel(x_ref, o_ref):
            # Squeezed refs: x_ref is (a, b) in input order, o_ref is (b, a).
            o_ref[...] = x_ref[...].T

    in_block = [out_block[inv[j]] for j in range(n)]
    keep_explicit_in = {order[k] for k in keep_explicit_out}

    grid = tuple(pl.cdiv(out_shape[k], out_block[k]) for k in range(n))

    # Squeeze unit block dims so the kernel sees dense, minimal-rank refs.
    out_bs = tuple(
        s if (s != 1 or k in keep_explicit_out) else None
        for k, s in enumerate(out_block))
    in_bs = tuple(
        s if (s != 1 or j in keep_explicit_in) else None
        for j, s in enumerate(in_block))

    def in_index_map(*g):
        return tuple(g[inv[j]] for j in range(n))

    def out_index_map(*g):
        return g

    block_bytes = int(math.prod(out_block)) * itemsize
    # ~ 2x double-buffered input + 2x output blocks + compiler-scratch margin.
    vmem_limit = int(min(limit_cap,
                         max(16 * 1024 * 1024, 4 * block_bytes + (8 << 20))))

    return pl.pallas_call(
        kernel,
        out_shape=jax.ShapeDtypeStruct(out_shape, x.dtype),
        grid_spec=pltpu.PrefetchScalarGridSpec(
            num_scalar_prefetch=0,
            grid=grid,
            in_specs=[pl.BlockSpec(in_bs, in_index_map)],
            out_specs=pl.BlockSpec(out_bs, out_index_map),
        ),
        compiler_params=pltpu.CompilerParams(
            dimension_semantics=("parallel",) * n,
            vmem_limit_bytes=vmem_limit,
        ),
        cost_estimate=pl.CostEstimate(
            flops=0, transcendentals=0,
            bytes_accessed=2 * x.size * itemsize),
    )(x)


# --------------------------------------------------------------------------- #
# Public entry points
# --------------------------------------------------------------------------- #
def _permute_array(x, order, block_budget_bytes=None):
    out_shape = tuple(x.shape[d] for d in order)
    if x.size == 0:
        return jnp.reshape(x, out_shape)

    red_shape, red_order = _reduce_permute(x.shape, order)
    m = len(red_order)

    # Metadata-only permute (identity after reduction): no kernel, no copy.
    if m <= 1 or red_order == tuple(range(m)):
        return jnp.reshape(x, out_shape)

    x_red = jnp.reshape(x, red_shape)
    y_red = _permute_pallas(x_red, red_order, block_budget_bytes)
    return jnp.reshape(y_red, out_shape)


def permute_layer(x, permute_order, *, _block_budget_bytes=None):
    """JAX/Pallas equivalent of PermuteLayer.forward: x.permute(permute_order)."""
    if x.ndim == 0:
        return x
    order = _normalize_order(permute_order, x.ndim)
    return _permute_array(x, order, _block_budget_bytes)


class PermuteLayer:
    """Thin stateless wrapper mirroring the PyTorch module."""

    def __init__(self, permute_order):
        self.permute_order = tuple(permute_order)

    def __call__(self, x):
        return permute_layer(x, self.permute_order)


if __name__ == "__main__":
    key = jax.random.PRNGKey(0)
    x = jax.random.normal(key, (2, 4, 16, 16), dtype=jnp.float32)

    # 1) NCHW -> NHWC (last dim moves): lane-dense 2-D-transpose kernel path.
    layer = PermuteLayer((0, 2, 3, 1))
    y = jax.block_until_ready(layer(x))
    assert y.shape == (2, 16, 16, 4), y.shape
    assert jnp.array_equal(y, jnp.transpose(x, (0, 2, 3, 1)))

    # 2) Head-style transpose (last dim fixed): grown-block identity-copy path.
    y = jax.block_until_ready(permute_layer(x, (0, 2, 1, 3)))
    assert y.shape == (2, 16, 4, 16), y.shape
    assert jnp.array_equal(y, jnp.transpose(x, (0, 2, 1, 3)))

    # 3) Identity permute: metadata-only fast path (no kernel launched).
    y = jax.block_until_ready(permute_layer(x, (0, 1, 2, 3)))
    assert jnp.array_equal(y, x)

    # 4) Reversal-style permute: previously 3 passes, now one transpose kernel.
    y = jax.block_until_ready(permute_layer(x, (2, 3, 1, 0)))
    assert y.shape == (16, 16, 4, 2), y.shape
    assert jnp.array_equal(y, jnp.transpose(x, (2, 3, 1, 0)))

    # 5) 5-D "exotic" permutation: still a single generalized kernel.
    x5 = jax.random.normal(jax.random.PRNGKey(1), (2, 3, 4, 5, 6),
                           dtype=jnp.float32)
    y = jax.block_until_ready(permute_layer(x5, (3, 1, 4, 0, 2)))
    assert y.shape == (5, 3, 6, 2, 4), y.shape
    assert jnp.array_equal(y, jnp.transpose(x5, (3, 1, 4, 0, 2)))

    # 6) Non-128-multiple dim with a tiny forced block budget: exercises the
    #    pl.cdiv grid + masked ragged tiles.
    x6 = jax.random.normal(jax.random.PRNGKey(2), (4, 8, 200),
                           dtype=jnp.float32)
    y = jax.block_until_ready(
        permute_layer(x6, (2, 0, 1), _block_budget_bytes=8 * 1024))
    assert y.shape == (200, 4, 8), y.shape
    assert jnp.array_equal(y, jnp.transpose(x6, (2, 0, 1)))

    print("KERNEL_OK")
</pallas_src>

<mosaic_0001>
module attributes {stable_mosaic.version = 11 : i64} {
  func.func @kernel(%arg0: i32, %arg1: i32, %arg2: i32, %arg3: memref<1x4x256xf32, #tpu.memory_space<vmem>>, %arg4: memref<1x256x4xf32, #tpu.memory_space<vmem>>) attributes {dimension_semantics = [#tpu.dimension_semantics<parallel>, #tpu.dimension_semantics<parallel>, #tpu.dimension_semantics<parallel>], iteration_bounds = array<i64: 2, 1, 1>, scalar_prefetch = 0 : i64, scratch_operands = 0 : i64, tpu.core_type = #tpu.core_type<tc>, window_params = [{transform_indices = @transform_0, window_bounds = array<i64: 1, 4, 256>}, {transform_indices = @transform_1, window_bounds = array<i64: 1, 256, 4>}]} {
    %c0 = arith.constant 0 : index
    %c0_0 = arith.constant 0 : index
    %c0_1 = arith.constant 0 : index
    %0 = vector.load %arg3[%c0, %c0_0, %c0_1] : memref<1x4x256xf32, #tpu.memory_space<vmem>>, vector<1x4x256xf32>
    %1 = vector.shape_cast %0 : vector<1x4x256xf32> to vector<4x256xf32>
    %2 = tpu.transpose %1, [1, 0] : vector<4x256xf32> -> vector<256x4xf32>
    %c0_2 = arith.constant 0 : index
    %c0_3 = arith.constant 0 : index
    %c0_4 = arith.constant 0 : index
    %3 = vector.load %arg4[%c0_2, %c0_3, %c0_4] : memref<1x256x4xf32, #tpu.memory_space<vmem>>, vector<1x256x4xf32>
    %4 = vector.shape_cast %3 : vector<1x256x4xf32> to vector<256x4xf32>
    %5 = vector.shape_cast %2 : vector<256x4xf32> to vector<1x256x4xf32>
    tpu.vector_store %arg4[%c0_2, %c0_3, %c0_4], %5 {strides = array<i32>} : memref<1x256x4xf32, #tpu.memory_space<vmem>>, vector<1x256x4xf32>,
    return
  }
  func.func @transform_0(%arg0: i32, %arg1: i32, %arg2: i32) -> (i32, i32, i32) {
    %c0_i32 = arith.constant 0 : i32
    return %arg0, %arg2, %arg1 : i32, i32, i32
  }
  func.func @transform_1(%arg0: i32, %arg1: i32, %arg2: i32) -> (i32, i32, i32) {
    %c0_i32 = arith.constant 0 : i32
    return %arg0, %arg1, %arg2 : i32, i32, i32
  }
}

</mosaic_0001>

<llo_original>
// kernel: tpu_custom_call.1
$region0: #{tpu_custom_call.1}
  #allocation0 [shape = 'u32[]', space=smem, size = 0x4, offset = 0x4, fixed_abs, tag = 'smem constant byte address 0x4 - core index']
  #allocation1 [shape = 'u32[144,128]{1,0:T(1,128)}', space=vmem, size = 0x12000, scoped, tag = 'internal scratch']
  %s0 = inlined_call_operand.hbm [shape: f32[2,4,256], index: 0, kind: input, shape index: {}]
  %s1 = inlined_call_operand.vmem [shape: f32[2,256,4], index: 1, kind: output, shape index: {}]
  %s2 = sld [smem:[#allocation0]]
  $region41: #{tpu_custom_call.1} parent=0
    _
  %s4 = ssub.s32 1, %s2
  %s5 = scalar_select 0, %s4, %s2
  $region1: #{tpu_custom_call.1} parent=0
    #allocation2 [shape = 'u8[8192]{0}', space=vmem, size = 0x2000, scoped, tag = 'input window, operand 0']
    #allocation3 [shape = 's32[2]{0}', space=sflag, size = 0x8, scoped, tag = 'scoped memory for tpu_custom_call.1']
    %6 = vsyncpa [#allocation3], 0
    %s7 = scalar_lea.sflag [#allocation3], 1
    %8 = vsyncpa %s7, 0
    loop: start=0, step=1, limit=4
    $region2: #{tpu_custom_call.1} parent=1 // loop_pre_header
      _
    $region3: #{tpu_custom_call.1} parent=1 // loop_header
      %s10 = sphi 0, %s14
      %p11 = scmp.ge.s32.totalorder %s10, 4
      %s17 = sphi 0, %s36
      %s18 = sphi 0, %s32
      %s19 = sphi 0, %s28
      %s20 = sphi 0, %s17
      %s21 = sphi 0, %s18
      %s22 = sphi 0, %s19
      %s23 = sphi 0, %s20
      %s24 = sphi 0, %s21
      %s25 = sphi 0, %s22
      %s43 = sphi 0, %s45
      %s46 = sphi 0, %s43
      %s47 = sphi 0, %s46
      %s63 = sphi 0, %s47
      %s73 = sphi 0, %s75
      %s76 = sphi 0, %s73
      %s77 = sphi 0, %s76
      %s93 = sphi 0, %s77
    $region4: #{tpu_custom_call.1} parent=1 // loop_header_branch
      %13 = sbr.rel (%p11) target = $region8
    $region5: #{tpu_custom_call.1} parent=1 // loop_body
      %s15 = ssub.s32 %s10, 1
      %s16 = ssub.s32 %s10, 2
      %s26 = sadd.s32 1, %s19
      %p27 = scmp.ge.s32.totalorder %s26, 1
      %s28 = scalar_select %p27, 0, %s26
      %s29 = sadd.s32 1, %s18
      %s30 = scalar_select %p27, %s29, %s18
      %p31 = scmp.ge.s32.totalorder %s30, 1
      %s32 = scalar_select %p31, 0, %s30
      %s33 = sadd.s32 1, %s17
      %s34 = scalar_select %p31, %s33, %s17
      %p35 = scmp.ge.s32.totalorder %s34, 2
      %s36 = scalar_select %p35, 0, %s34
      %s37 = ssub.s32 %s17, %s36
      %s38 = ssub.s32 %s19, %s28
      %s39 = sor.u32 %s37, %s38
      %s40 = ssub.s32 %s18, %s32
      %s41 = sor.u32 %s39, %s40
      %p42 = scmp.eq.s32.totalorder %s41, 0
      %s44 = sadd.s32 %s43, 1
      %s45 = scalar_select %p42, %s43, %s44
      %p48 = pneg %p42
      %p49 = scmp.eq.s32.totalorder %s10, 1
      %p50 = por %p48, %p49
      %p51 = scmp.ne.s32.totalorder %s43, %s46
      %p52 = scmp.eq.s32.totalorder %s10, 0
      %p53 = por %p51, %p52
      %p54 = scmp.ne.s32.totalorder %s43, %s46
      %p55 = scmp.eq.s32.totalorder %s15, 1
      %p56 = por %p54, %p55
      %p57 = scmp.ne.s32.totalorder %s46, %s47
      %p58 = scmp.eq.s32.totalorder %s15, 0
      %p59 = por %p57, %p58
      %p60 = scmp.ne.s32.totalorder %s46, %s47
      %p61 = scmp.eq.s32.totalorder %s16, 1
      %p62 = por %p60, %p61
      %p64 = scmp.ne.s32.totalorder %s47, %s63
      %p65 = scmp.eq.s32.totalorder %s16, 0
      %p66 = por %p64, %p65
      %s67 = ssub.s32 %s17, %s36
      %s68 = ssub.s32 %s18, %s32
      %s69 = sor.u32 %s67, %s68
      %s70 = ssub.s32 %s19, %s28
      %s71 = sor.u32 %s69, %s70
      %p72 = scmp.eq.s32.totalorder %s71, 0
      %s74 = sadd.s32 %s73, 1
      %s75 = scalar_select %p72, %s73, %s74
      %p78 = pneg %p72
      %p79 = scmp.eq.s32.totalorder %s10, 1
      %p80 = por %p78, %p79
      %p81 = scmp.ne.s32.totalorder %s73, %s76
      %p82 = scmp.eq.s32.totalorder %s10, 0
      %p83 = por %p81, %p82
      %p84 = scmp.ne.s32.totalorder %s73, %s76
      %p85 = scmp.eq.s32.totalorder %s15, 1
      %p86 = por %p84, %p85
      %p87 = scmp.ne.s32.totalorder %s76, %s77
      %p88 = scmp.eq.s32.totalorder %s15, 0
      %p89 = por %p87, %p88
      %p90 = scmp.ne.s32.totalorder %s76, %s77
      %p91 = scmp.eq.s32.totalorder %s16, 1
      %p92 = por %p90, %p91
      %p94 = scmp.ne.s32.totalorder %s77, %s93
      %p95 = scmp.eq.s32.totalorder %s16, 0
      %p96 = por %p94, %p95
      %p97 = scmp.le.s32.totalorder 1, %s10
      %p98 = scmp.lt.s32.totalorder %s10, 3
      %p99 = pnand %p97, %p98
      %p100 = pneg %p99
      // Predicated region
      $region9: #{tpu_custom_call.1} parent=5 // pred_check
        _
      $region10: #{tpu_custom_call.1} parent=5 // pred_check_branch
        %102 = sbr.rel (%p99) target = $region12
      $region11: #{tpu_custom_call.1} parent=5 // pred_region
        %s103 = ssub.s32 %s10, 1
      $region12: #{tpu_custom_call.1} parent=5 // pred_fallthru
        _
      %p104 = scmp.lt.s32.totalorder %s10, 2
      // Predicated region
      $region13: #{tpu_custom_call.1} parent=5 // pred_check
        %p105 = pneg %p104
      $region14: #{tpu_custom_call.1} parent=5 // pred_check_branch
        %107 = sbr.rel (%p105) target = $region16
      $region15: #{tpu_custom_call.1} parent=5 // pred_region
        // Predicated region
        $region17: #{tpu_custom_call.1} parent=15 // pred_check
          %p108 = pneg %p53
        $region18: #{tpu_custom_call.1} parent=15 // pred_check_branch
          %110 = sbr.rel (%p108) target = $region20
        $region19: #{tpu_custom_call.1} parent=15 // pred_region
          %s111 = sand.u32 %s43, 1
          %s112 = scalar_lea.sflag [#allocation3], %s111
          %s113 = sand.u32 %s43, 1
          %s114 = smul.addr %s113, 8
          %s115 = scalar_lea.vmem [#allocation2], %s114
          %s116 = smul.u32 2, %s18
          %s118 = ssub.s32 128, 128
          %119 = vsyncadd %s112, %s118
          %s120 = smul.addr %s19, 2
          %s121 = sadd.s32 %s116, %s120
          %s122 = smul.addr %s17, 2
          %s123 = sadd.s32 %s121, %s122
          %s124 = smul.addr %s123, 64
          %s125 = scalar_lea.hbm %s0, %s124
          %s127 = sshll.u32 %s115, 4
          %s128 = int_to_ptr.vmem [resolvable:$true] %s127
          %130 = dma.hbm_to_vmem [thread:$0]  %s125, 128, %s128, %s112
        $region20: #{tpu_custom_call.1} parent=15 // pred_fallthru
          _
      $region16: #{tpu_custom_call.1} parent=5 // pred_fallthru
        _
      %p131 = scmp.le.s32.totalorder 1, %s10
      %p132 = scmp.lt.s32.totalorder %s10, 3
      %p133 = pnand %p131, %p132
      %p134 = pneg %p133
      // Predicated region
      $region21: #{tpu_custom_call.1} parent=5 // pred_check
        _
      $region22: #{tpu_custom_call.1} parent=5 // pred_check_branch
        %136 = sbr.rel (%p133) target = $region24
      $region23: #{tpu_custom_call.1} parent=5 // pred_region
        %s137 = ssub.s32 %s10, 1
        %s138 = sand.u32 %s46, 1
        %s139 = scalar_lea.sflag [#allocation3], %s138
        %s140 = sand.u32 %s46, 1
        %s141 = smul.addr %s140, 8
        %s142 = scalar_lea.vmem [#allocation2], %s141
        // Predicated region
        $region25: #{tpu_custom_call.1} parent=23 // pred_check
          %p143 = pneg %p59
        $region26: #{tpu_custom_call.1} parent=23 // pred_check_branch
          %145 = sbr.rel (%p143) target = $region28
        $region27: #{tpu_custom_call.1} parent=23 // pred_region
          %146 = dma.done %s139, 128
        $region28: #{tpu_custom_call.1} parent=23 // pred_fallthru
          _
        %s147 = sand.u32 %s46, 1
        %s148 = scalar_lea.sflag [#allocation3], %s147
        %s149 = sand.u32 %s46, 1
        %s150 = smul.addr %s149, 8
        %s151 = scalar_lea.vmem [#allocation2], %s150
        %p152 = pneg %p59
        %p153 = pneg %p56
        %p154 = pneg %p89
        %p155 = pneg %p86
        %s156 = smul.u32 32, %s21
        %p157 = scmp.lt.s32.totalorder %s20, 1
        %s158 = scalar_select %p157, %s20, 1
        %p159 = scmp.lt.s32.totalorder %s156, 31
        %s160 = scalar_select %p159, %s156, 31
        %p161 = scmp.lt.s32.totalorder %s22, 0
        %s162 = scalar_select %p161, %s22, 0
        %s163 = sadd.s32 %s162, %s160
        %s164 = smul.addr %s158, 32
        %s165 = sadd.s32 %s163, %s164
        %s166 = smul.addr %s165, 8
        %s167 = scalar_lea.vmem %s1, %s166
        %s168 = smul.u32 2, %s21
        %s169 = smul.u32 32, %s21
        %p170 = scmp.lt.s32.totalorder %s20, 1
        %s171 = scalar_select %p170, %s20, 1
        %p172 = scmp.lt.s32.totalorder %s169, 31
        %s173 = scalar_select %p172, %s169, 31
        %p174 = scmp.lt.s32.totalorder %s22, 0
        %s175 = scalar_select %p174, %s22, 0
        %s176 = sadd.s32 %s175, %s173
        %s177 = smul.addr %s171, 32
        %s178 = sadd.s32 %s176, %s177
        %s179 = smul.addr %s178, 8
        %s180 = scalar_lea.vmem %s1, %s179
        %s181 = smul.u32 32, %s21
        %v182 = vld [vmem:[%s142] sm:$0xff]
        %v184 = vcombine.high %v182, %v182
        %186 = vxpose.xlu0.b32.start [1/16] %v182, 128
        %187 = vxpose.xlu0.b32.cont [2/16] 0.0, 128
        %188 = vxpose.xlu0.b32.cont [3/16] 0.0, 128
        %189 = vxpose.xlu0.b32.cont [4/16] 0.0, 128
        %190 = vxpose.xlu0.b32.cont [5/16] 0.0, 128
        %191 = vxpose.xlu0.b32.cont [6/16] 0.0, 128
        %192 = vxpose.xlu0.b32.cont [7/16] 0.0, 128
        %193 = vxpose.xlu0.b32.cont [8/16] 0.0, 128
        %194 = vxpose.xlu0.b32.cont [9/16] 0.0, 128
        %195 = vxpose.xlu0.b32.cont [10/16] 0.0, 128
        %196 = vxpose.xlu0.b32.cont [11/16] 0.0, 128
        %197 = vxpose.xlu0.b32.cont [12/16] 0.0, 128
        %198 = vxpose.xlu0.b32.cont [13/16] 0.0, 128
        %199 = vxpose.xlu0.b32.cont [14/16] 0.0, 128
        %200 = vxpose.xlu0.b32.cont [15/16] 0.0, 128
        %201 = vxpose.xlu0.b32.end [16/16] 0.0, 128
        %v202 = vpop.trf.xlu0
        %v203 = vpop.trf.xlu0
        %v204 = vpop.trf.xlu0
        %v205 = vpop.trf.xlu0
        %v206 = vpop.trf.xlu0
        %v207 = vpop.trf.xlu0
        %v208 = vpop.trf.xlu0
        %v209 = vpop.trf.xlu0
        %v210 = vpop.trf.xlu0
        %v211 = vpop.trf.xlu0
        %v212 = vpop.trf.xlu0
        %v213 = vpop.trf.xlu0
        %v214 = vpop.trf.xlu0
        %v215 = vpop.trf.xlu0
        %v216 = vpop.trf.xlu0
        %v217 = vpop.trf.xlu0
        %218 = vxpose.xlu0.b32.start [1/16] %v184, 128
        %219 = vxpose.xlu0.b32.cont [2/16] 0.0, 128
        %220 = vxpose.xlu0.b32.cont [3/16] 0.0, 128
        %221 = vxpose.xlu0.b32.cont [4/16] 0.0, 128
        %222 = vxpose.xlu0.b32.cont [5/16] 0.0, 128
        %223 = vxpose.xlu0.b32.cont [6/16] 0.0, 128
        %224 = vxpose.xlu0.b32.cont [7/16] 0.0, 128
        %225 = vxpose.xlu0.b32.cont [8/16] 0.0, 128
        %226 = vxpose.xlu0.b32.cont [9/16] 0.0, 128
        %227 = vxpose.xlu0.b32.cont [10/16] 0.0, 128
        %228 = vxpose.xlu0.b32.cont [11/16] 0.0, 128
        %229 = vxpose.xlu0.b32.cont [12/16] 0.0, 128
        %230 = vxpose.xlu0.b32.cont [13/16] 0.0, 128
        %231 = vxpose.xlu0.b32.cont [14/16] 0.0, 128
        %232 = vxpose.xlu0.b32.cont [15/16] 0.0, 128
        %233 = vxpose.xlu0.b32.end [16/16] 0.0, 128
        %v234 = vpop.trf.xlu0
        %v235 = vpop.trf.xlu0
        %v236 = vpop.trf.xlu0
        %v237 = vpop.trf.xlu0
        %v238 = vpop.trf.xlu0
        %v239 = vpop.trf.xlu0
        %v240 = vpop.trf.xlu0
        %v241 = vpop.trf.xlu0
        %v242 = vpop.trf.xlu0
        %v243 = vpop.trf.xlu0
        %v244 = vpop.trf.xlu0
        %v245 = vpop.trf.xlu0
        %v246 = vpop.trf.xlu0
        %v247 = vpop.trf.xlu0
        %v248 = vpop.trf.xlu0
        %v249 = vpop.trf.xlu0
        %vm250 = vcmask 31744
        %251 = vst.msk [vmem:[%s180] sm:$0xff] %vm250, %v202
        %252 = vst.msk [vmem:[%s180 + $0x8] sm:$0xff] %vm250, %v203
        %253 = vst.msk [vmem:[%s180 + $0x10] sm:$0xff] %vm250, %v204
        %254 = vst.msk [vmem:[%s180 + $0x18] sm:$0xff] %vm250, %v205
        %255 = vst.msk [vmem:[%s180 + $0x20] sm:$0xff] %vm250, %v206
        %256 = vst.msk [vmem:[%s180 + $0x28] sm:$0xff] %vm250, %v207
        %257 = vst.msk [vmem:[%s180 + $0x30] sm:$0xff] %vm250, %v208
        %258 = vst.msk [vmem:[%s180 + $0x38] sm:$0xff] %vm250, %v209
        %259 = vst.msk [vmem:[%s180 + $0x40] sm:$0xff] %vm250, %v210
        %260 = vst.msk [vmem:[%s180 + $0x48] sm:$0xff] %vm250, %v211
        %261 = vst.msk [vmem:[%s180 + $0x50] sm:$0xff] %vm250, %v212
        %262 = vst.msk [vmem:[%s180 + $0x58] sm:$0xff] %vm250, %v213
        %263 = vst.msk [vmem:[%s180 + $0x60] sm:$0xff] %vm250, %v214
        %264 = vst.msk [vmem:[%s180 + $0x68] sm:$0xff] %vm250, %v215
        %265 = vst.msk [vmem:[%s180 + $0x70] sm:$0xff] %vm250, %v216
        %266 = vst.msk [vmem:[%s180 + $0x78] sm:$0xff] %vm250, %v217
        %267 = vst.msk [vmem:[%s180 + $0x80] sm:$0xff] %vm250, %v234
        %268 = vst.msk [vmem:[%s180 + $0x88] sm:$0xff] %vm250, %v235
        %269 = vst.msk [vmem:[%s180 + $0x90] sm:$0xff] %vm250, %v236
        %270 = vst.msk [vmem:[%s180 + $0x98] sm:$0xff] %vm250, %v237
        %271 = vst.msk [vmem:[%s180 + $0xa0] sm:$0xff] %vm250, %v238
        %272 = vst.msk [vmem:[%s180 + $0xa8] sm:$0xff] %vm250, %v239
        %273 = vst.msk [vmem:[%s180 + $0xb0] sm:$0xff] %vm250, %v240
        %274 = vst.msk [vmem:[%s180 + $0xb8] sm:$0xff] %vm250, %v241
        %275 = vst.msk [vmem:[%s180 + $0xc0] sm:$0xff] %vm250, %v242
        %276 = vst.msk [vmem:[%s180 + $0xc8] sm:$0xff] %vm250, %v243
        %277 = vst.msk [vmem:[%s180 + $0xd0] sm:$0xff] %vm250, %v244
        %278 = vst.msk [vmem:[%s180 + $0xd8] sm:$0xff] %vm250, %v245
        %279 = vst.msk [vmem:[%s180 + $0xe0] sm:$0xff] %vm250, %v246
        %280 = vst.msk [vmem:[%s180 + $0xe8] sm:$0xff] %vm250, %v247
        %281 = vst.msk [vmem:[%s180 + $0xf0] sm:$0xff] %vm250, %v248
        %282 = vst.msk [vmem:[%s180 + $0xf8] sm:$0xff] %vm250, %v249
        %s283 = smul.u32 32, %s21
        %p284 = scmp.lt.s32.totalorder %s20, 1
        %s285 = scalar_select %p284, %s20, 1
        %p286 = scmp.lt.s32.totalorder %s283, 31
        %s287 = scalar_select %p286, %s283, 31
        %p288 = scmp.lt.s32.totalorder %s22, 0
        %s289 = scalar_select %p288, %s22, 0
        %s290 = sadd.s32 %s289, %s287
        %s291 = smul.addr %s285, 32
        %s292 = sadd.s32 %s290, %s291
        %s293 = smul.addr %s292, 8
        %s294 = scalar_lea.vmem %s1, %s293
        // Predicated region
        $region29: #{tpu_custom_call.1} parent=23 // pred_check
          %p295 = pneg %p86
        $region30: #{tpu_custom_call.1} parent=23 // pred_check_branch
          %297 = sbr.rel (%p295) target = $region32
        $region31: #{tpu_custom_call.1} parent=23 // pred_region
          %s298 = smul.u32 32, %s21
        $region32: #{tpu_custom_call.1} parent=23 // pred_fallthru
          _
      $region24: #{tpu_custom_call.1} parent=5 // pred_fallthru
        _
      %p299 = scmp.le.s32.totalorder 2, %s10
      // Predicated region
      $region33: #{tpu_custom_call.1} parent=5 // pred_check
        %p300 = pneg %p299
      $region34: #{tpu_custom_call.1} parent=5 // pred_check_branch
        %302 = sbr.rel (%p300) target = $region36
      $region35: #{tpu_custom_call.1} parent=5 // pred_region
        %s303 = ssub.s32 %s10, 2
        // Predicated region
        $region37: #{tpu_custom_call.1} parent=35 // pred_check
          %p304 = pneg %p92
        $region38: #{tpu_custom_call.1} parent=35 // pred_check_branch
          %306 = sbr.rel (%p304) target = $region40
        $region39: #{tpu_custom_call.1} parent=35 // pred_region
          %s307 = smul.u32 32, %s24
          %p308 = scmp.lt.s32.totalorder %s23, 1
          %s309 = scalar_select %p308, %s23, 1
          %p310 = scmp.lt.s32.totalorder %s307, 31
          %s311 = scalar_select %p310, %s307, 31
          %p312 = scmp.lt.s32.totalorder %s25, 0
          %s313 = scalar_select %p312, %s25, 0
          %s314 = sadd.s32 %s313, %s311
          %s315 = smul.addr %s309, 32
          %s316 = sadd.s32 %s314, %s315
          %s317 = smul.addr %s316, 8
          %s318 = scalar_lea.vmem %s1, %s317
        $region40: #{tpu_custom_call.1} parent=35 // pred_fallthru
          _
      $region36: #{tpu_custom_call.1} parent=5 // pred_fallthru
        _
    $region6: #{tpu_custom_call.1} parent=1 // loop_footer
      %s14 = sadd.s32 1, %s10
    $region7: #{tpu_custom_call.1} parent=1 // loop_footer_branch
      %9 = sbr.rel target = $region3
    $region8: #{tpu_custom_call.1} parent=1 // loop_exit
      _
    %319 = vsyncpa [#allocation3], 1
    %s320 = scalar_lea.sflag [#allocation3], 1
    %321 = vsyncpa %s320, 1

</llo_original>
